<compile_context>
chip_gen: v7x
topology: tpu7x:2x2x1
jax: 0.10.0
libtpu: 0.0.40
codegen_flags: <defaults>
</compile_context>

<pallas_src>
import jax
import jax.numpy as jnp
from jax.experimental import pallas as pl
from jax.experimental.pallas import tpu as pltpu

EPS = 1e-5  # torch.nn.LayerNorm default


def _round_up(x, m):
    return ((x + m - 1) // m) * m


def prenorm_kernel(x_ref, w_ref, b_ref, o_ref, xn_ref):
    # x_ref: (tm, D) rows; w_ref: (D, tn) bf16 (gamma folded in);
    # b_ref: (1, tn) f32 (beta @ W + bias); xn_ref: (tm, D) bf16 scratch.
    #
    # LayerNorm runs only at the first column step of each row tile; the
    # normalized bf16 rows are cached in VMEM scratch and reused for j > 0.
    @pl.when(pl.program_id(1) == 0)
    def _():
        x = x_ref[...].astype(jnp.float32)
        d = x.shape[-1]
        # One-pass statistics: E[x], E[x^2]  (var = E[x^2] - mean^2).
        s = jnp.sum(x, axis=-1, keepdims=True)
        ss = jnp.sum(x * x, axis=-1, keepdims=True)
        mean = s * (1.0 / d)
        var = jnp.maximum(ss * (1.0 / d) - mean * mean, 0.0)
        inv = jax.lax.rsqrt(var + EPS)
        xn_ref[...] = ((x - mean) * inv).astype(jnp.bfloat16)

    # fn(x): Linear column tile on the MXU, bf16 inputs, f32 accumulation.
    y = jnp.dot(xn_ref[...], w_ref[...], preferred_element_type=jnp.float32)
    o_ref[...] = (y + b_ref[...]).astype(o_ref.dtype)


def _vmem_budget_bytes():
    try:
        cap = int(pltpu.get_tpu_info().vmem_capacity_bytes)
    except Exception:
        cap = 0
    if cap <= 0:
        cap = 64 << 20  # conservative default (v7x per-TensorCore VMEM)
    # ~75% of physical VMEM: ~48 MiB on v7x, ~96 MiB on v5e/v6e.
    return (cap * 3) // 4


def _tile_bytes(tm, tn, D, in_itemsize, out_itemsize):
    return (2 * tm * D * in_itemsize      # double-buffered x row tile
            + 2 * D * tn * 2              # double-buffered bf16 W column tile
            + 2 * tm * tn * out_itemsize  # double-buffered output tile
            + 2 * tn * 4                  # fused-bias tile
            + tm * D * 2)                 # xn scratch (bf16, single buffer)


def _pick_tiles(N, D, in_itemsize, out_itemsize, budget):
    n8 = _round_up(N, 8)
    tm_cands = [c for c in (1024, 512, 256, 128, 64, 32, 16, 8) if c <= n8] or [8]
    tm_min = tm_cands[-1]

    # Column tile: prefer full D (W stays VMEM-resident, fetched once),
    # otherwise the largest 256/128-multiple divisor of D that fits.
    if D % 128 == 0:
        tn_cands = [D] + [c for c in (512, 256, 128) if c < D and D % c == 0]
    else:
        tn_cands = [D]
    tn = tn_cands[-1]
    for cand in tn_cands:
        if _tile_bytes(tm_min, cand, D, in_itemsize, out_itemsize) <= budget:
            tn = cand
            break

    # Row tile: largest that fits the budget with <= ~15% padded rows;
    # otherwise the fitting candidate minimizing padding.
    fitting = [c for c in tm_cands
               if _tile_bytes(c, tn, D, in_itemsize, out_itemsize) <= budget] or [tm_min]
    good = [c for c in fitting if _round_up(N, c) <= max(int(1.15 * N), n8)]
    tm = good[0] if good else min(fitting, key=lambda c: (_round_up(N, c), -c))
    return tm, tn


def prenorm_forward(x, gamma, beta, w, b, *, tm=None, tn=None):
    """PreNorm(dim, Linear(dim, dim)): returns LayerNorm(x) @ w + b.

    x: (B, S, D).  w is laid out so the op is x @ w (i.e. the transpose of a
    PyTorch nn.Linear .weight must be passed for a real checkpoint).
    """
    B, S, D = x.shape
    N = B * S
    in_itemsize = x.dtype.itemsize
    out_dtype = x.dtype
    out_itemsize = jnp.dtype(out_dtype).itemsize

    budget = _vmem_budget_bytes()
    auto_tm, auto_tn = _pick_tiles(N, D, in_itemsize, out_itemsize, budget)
    tm = auto_tm if tm is None else tm
    tn = auto_tn if tn is None else tn
    assert tm % 8 == 0
    assert D % tn == 0

    Np = _round_up(N, tm)
    x2 = x.reshape(N, D)
    if Np != N:
        # Zero-pad ragged rows; padded rows give var=0 (guarded by eps), are
        # finite, and are sliced off below.
        x2 = jnp.pad(x2, ((0, Np - N), (0, 0)))

    # Fold the LayerNorm affine into the Linear parameters (in f32, cast once):
    #   (xn*gamma + beta) @ W + b == xn @ (gamma[:,None]*W) + (beta @ W + b)
    gamma_f = gamma.astype(jnp.float32)
    beta_f = beta.astype(jnp.float32)
    w_f = w.astype(jnp.float32)
    w_eff = (gamma_f[:, None] * w_f).astype(jnp.bfloat16)          # (D, D) bf16
    b_eff = (beta_f @ w_f + b.astype(jnp.float32)).reshape(1, D)   # (1, D) f32

    n_row = Np // tm
    n_col = D // tn

    footprint = _tile_bytes(tm, tn, D, in_itemsize, out_itemsize)
    vmem_limit = int(min(budget, max(32 << 20, footprint + (8 << 20))))

    cost = pl.CostEstimate(
        flops=2 * Np * D * D + 8 * Np * D,
        transcendentals=Np,  # one rsqrt per row
        bytes_accessed=(Np * D * (in_itemsize + out_itemsize)          # x, out once
                        + (1 if n_col == 1 else n_row) * D * D * 2     # bf16 W
                        + n_row * n_col * tn * 4),                     # fused bias
    )

    out = pl.pallas_call(
        prenorm_kernel,
        out_shape=jax.ShapeDtypeStruct((Np, D), out_dtype),
        grid_spec=pltpu.PrefetchScalarGridSpec(
            num_scalar_prefetch=0,
            grid=(n_row, n_col),
            in_specs=[
                pl.BlockSpec((tm, D), lambda i, j: (i, 0)),   # x rows (invariant in j)
                pl.BlockSpec((D, tn), lambda i, j: (0, j)),   # W column tile (bf16)
                pl.BlockSpec((1, tn), lambda i, j: (0, j)),   # fused-bias column tile
            ],
            out_specs=pl.BlockSpec((tm, tn), lambda i, j: (i, j)),
            scratch_shapes=[pltpu.VMEM((tm, D), jnp.bfloat16)],  # cached xn
        ),
        compiler_params=pltpu.CompilerParams(
            # Rows megacore-sharded; columns sequential per core so the xn
            # scratch written at j == 0 is valid for j > 0.
            dimension_semantics=("parallel", "arbitrary"),
            vmem_limit_bytes=vmem_limit,
        ),
        cost_estimate=cost,
    )(x2, w_eff, b_eff)

    if Np != N:
        out = out[:N]
    return out.reshape(B, S, D)


def prenorm_reference(x, gamma, beta, w, b):
    mean = jnp.mean(x, axis=-1, keepdims=True)
    var = jnp.mean((x - mean) ** 2, axis=-1, keepdims=True)
    xn = (x - mean) * jax.lax.rsqrt(var + EPS) * gamma + beta
    return xn @ w + b


if __name__ == "__main__":
    key = jax.random.PRNGKey(0)
    B, S, D = 2, 8, 32  # batch=2, seq=8, hidden(dim)=32

    k_x, k_w, k_g, k_b = jax.random.split(key, 4)
    x = jax.random.normal(k_x, (B, S, D), dtype=jnp.float32)

    # Deterministic synthetic parameters (not a checkpoint).  gamma/beta are
    # perturbed away from the PyTorch init to exercise the affine fold.
    gamma = 1.0 + 0.1 * jax.random.normal(k_g, (D,), dtype=jnp.float32)
    beta = 0.1 * jax.random.normal(k_b, (D,), dtype=jnp.float32)
    # fn = Linear(D, D): small random weight, zero bias.
    w = jax.random.normal(k_w, (D, D), dtype=jnp.float32) * (1.0 / jnp.sqrt(D))
    b = jnp.zeros((D,), dtype=jnp.float32)

    out = prenorm_forward(x, gamma, beta, w, b)
    out = jax.block_until_ready(out)

    ref = prenorm_reference(x, gamma, beta, w, b)
    assert out.shape == (B, S, D)
    # bf16 MXU inputs with f32 accumulation -> loosened tolerance vs f32 ref.
    assert jnp.allclose(out, ref, atol=2e-2, rtol=2e-2), "mismatch vs reference"

    print("KERNEL_OK")
</pallas_src>

<mosaic_0001>
module attributes {stable_mosaic.version = 11 : i64} {
  func.func @prenorm_kernel(%arg0: i32, %arg1: i32, %arg2: memref<16x32xf32, #tpu.memory_space<vmem>>, %arg3: memref<32x32xbf16, #tpu.memory_space<vmem>>, %arg4: memref<1x32xf32, #tpu.memory_space<vmem>>, %arg5: memref<16x32xf32, #tpu.memory_space<vmem>>, %arg6: memref<16x32xbf16, #tpu.memory_space<vmem>>) attributes {dimension_semantics = [#tpu.dimension_semantics<parallel>, #tpu.dimension_semantics<arbitrary>], iteration_bounds = array<i64: 1, 1>, scalar_prefetch = 0 : i64, scratch_operands = 1 : i64, tpu.core_type = #tpu.core_type<tc>, window_params = [{transform_indices = @transform_0, window_bounds = array<i64: 16, 32>}, {transform_indices = @transform_1, window_bounds = array<i64: 32, 32>}, {transform_indices = @transform_2, window_bounds = array<i64: 1, 32>}, {transform_indices = @transform_3, window_bounds = array<i64: 16, 32>}]} {
    %c0_i32 = arith.constant 0 : i32
    %0 = arith.cmpi eq, %arg1, %c0_i32 : i32
    %1 = arith.extui %0 : i1 to i32
    %c0_i32_0 = arith.constant 0 : i32
    %2 = arith.cmpi ne, %1, %c0_i32_0 : i32
    scf.if %2 {
      %c0_8 = arith.constant 0 : index
      %c0_9 = arith.constant 0 : index
      %10 = vector.load %arg2[%c0_8, %c0_9] : memref<16x32xf32, #tpu.memory_space<vmem>>, vector<16x32xf32>
      %cst_10 = arith.constant dense<0.000000e+00> : vector<16xf32>
      %11 = vector.multi_reduction <add>, %10, %cst_10 [1] : vector<16x32xf32> to vector<16xf32>
      %12 = vector.shape_cast %11 : vector<16xf32> to vector<16x1xf32>
      %13 = arith.mulf %10, %10 : vector<16x32xf32>
      %cst_11 = arith.constant dense<0.000000e+00> : vector<16xf32>
      %14 = vector.multi_reduction <add>, %13, %cst_11 [1] : vector<16x32xf32> to vector<16xf32>
      %15 = vector.shape_cast %14 : vector<16xf32> to vector<16x1xf32>
      %cst_12 = arith.constant 3.125000e-02 : f32
      %16 = vector.broadcast %cst_12 : f32 to vector<16x1xf32>
      %17 = arith.mulf %12, %16 : vector<16x1xf32>
      %cst_13 = arith.constant 3.125000e-02 : f32
      %18 = vector.broadcast %cst_13 : f32 to vector<16x1xf32>
      %19 = arith.mulf %15, %18 : vector<16x1xf32>
      %20 = arith.mulf %17, %17 : vector<16x1xf32>
      %21 = arith.subf %19, %20 : vector<16x1xf32>
      %cst_14 = arith.constant 0.000000e+00 : f32
      %22 = vector.broadcast %cst_14 : f32 to vector<16x1xf32>
      %23 = arith.maximumf %21, %22 : vector<16x1xf32>
      %cst_15 = arith.constant 9.99999974E-6 : f32
      %24 = vector.broadcast %cst_15 : f32 to vector<16x1xf32>
      %25 = arith.addf %23, %24 : vector<16x1xf32>
      %26 = math.rsqrt %25 : vector<16x1xf32>
      %27 = vector.broadcast %17 : vector<16x1xf32> to vector<16x32xf32>
      %28 = arith.subf %10, %27 : vector<16x32xf32>
      %29 = vector.broadcast %26 : vector<16x1xf32> to vector<16x32xf32>
      %30 = arith.mulf %28, %29 : vector<16x32xf32>
      %31 = arith.truncf %30 : vector<16x32xf32> to vector<16x32xbf16>
      %c0_16 = arith.constant 0 : index
      %c0_17 = arith.constant 0 : index
      %32 = vector.load %arg6[%c0_16, %c0_17] : memref<16x32xbf16, #tpu.memory_space<vmem>>, vector<16x32xbf16>
      tpu.vector_store %arg6[%c0_16, %c0_17], %31 {strides = array<i32>} : memref<16x32xbf16, #tpu.memory_space<vmem>>, vector<16x32xbf16>,
    } else {
    }
    %c0 = arith.constant 0 : index
    %c0_1 = arith.constant 0 : index
    %3 = vector.load %arg6[%c0, %c0_1] : memref<16x32xbf16, #tpu.memory_space<vmem>>, vector<16x32xbf16>
    %c0_2 = arith.constant 0 : index
    %c0_3 = arith.constant 0 : index
    %4 = vector.load %arg3[%c0_2, %c0_3] : memref<32x32xbf16, #tpu.memory_space<vmem>>, vector<32x32xbf16>
    %cst = arith.constant dense<0.000000e+00> : vector<16x32xf32>
    %5 = tpu.matmul %3, %4, %cst {dimension_numbers = #tpu.dot_dimension_numbers<[1], [0], [0], [1], [0, 0, 1, 1], [], []>} : vector<16x32xbf16>, vector<32x32xbf16>, vector<16x32xf32> -> vector<16x32xf32>
    %c0_4 = arith.constant 0 : index
    %c0_5 = arith.constant 0 : index
    %6 = vector.load %arg4[%c0_4, %c0_5] : memref<1x32xf32, #tpu.memory_space<vmem>>, vector<1x32xf32>
    %7 = vector.broadcast %6 : vector<1x32xf32> to vector<16x32xf32>
    %8 = arith.addf %5, %7 : vector<16x32xf32>
    %c0_6 = arith.constant 0 : index
    %c0_7 = arith.constant 0 : index
    %9 = vector.load %arg5[%c0_6, %c0_7] : memref<16x32xf32, #tpu.memory_space<vmem>>, vector<16x32xf32>
    tpu.vector_store %arg5[%c0_6, %c0_7], %8 {strides = array<i32>} : memref<16x32xf32, #tpu.memory_space<vmem>>, vector<16x32xf32>,
    return
  }
  func.func @transform_0(%arg0: i32, %arg1: i32) -> (i32, i32) {
    %c0_i32 = arith.constant 0 : i32
    %c0_i32_0 = arith.constant 0 : i32
    return %arg0, %c0_i32 : i32, i32
  }
  func.func @transform_1(%arg0: i32, %arg1: i32) -> (i32, i32) {
    %c0_i32 = arith.constant 0 : i32
    %c0_i32_0 = arith.constant 0 : i32
    return %c0_i32, %arg1 : i32, i32
  }
  func.func @transform_2(%arg0: i32, %arg1: i32) -> (i32, i32) {
    %c0_i32 = arith.constant 0 : i32
    %c0_i32_0 = arith.constant 0 : i32
    return %c0_i32, %arg1 : i32, i32
  }
  func.func @transform_3(%arg0: i32, %arg1: i32) -> (i32, i32) {
    %c0_i32 = arith.constant 0 : i32
    return %arg0, %arg1 : i32, i32
  }
}

</mosaic_0001>

<llo_original>
// kernel: tpu_custom_call.1
$region0: #{tpu_custom_call.1}
  #allocation0 [shape = 'u32[]', space=smem, size = 0x4, offset = 0x4, fixed_abs, tag = 'smem constant byte address 0x4 - core index']
  #allocation1 [shape = 'u32[144,128]{1,0:T(1,128)}', space=vmem, size = 0x12000, scoped, tag = 'internal scratch']
  #allocation2 [shape = 'bf16[16,32]{1,0:T(16,128)(2,1)}', space=vmem, size = 0x1000, scoped, tag = 'scratch operand']
  %s0 = inlined_call_operand.hbm [shape: f32[16,32], index: 0, kind: input, shape index: {}]
  %s1 = inlined_call_operand.hbm [shape: bf16[32,32], index: 1, kind: input, shape index: {}]
  %s2 = inlined_call_operand.vmem [shape: f32[1,32], index: 2, kind: input, shape index: {}]
  %s3 = inlined_call_operand.hbm [shape: f32[16,32], index: 3, kind: output, shape index: {}]
  %s4 = sld [smem:[#allocation0]]
  $region34: #{tpu_custom_call.1} parent=0
    _
  %s6 = ssub.s32 1, %s4
  %s7 = scalar_select 0, %s6, %s4
  $region1: #{tpu_custom_call.1} parent=0
    #allocation3 [shape = 'u8[8192]{0}', space=vmem, size = 0x2000, scoped, tag = 'input window, operand 0, single buffered']
    #allocation4 [shape = 's32[1]{0}', space=sflag, size = 0x4, scoped, tag = 'scoped memory for tpu_custom_call.1']
    #allocation5 [shape = 's32[1]{0}', space=sflag, size = 0x4, scoped, tag = 'scoped memory for tpu_custom_call.1']
    #allocation6 [shape = 'u8[8192]{0}', space=vmem, size = 0x2000, scoped, tag = 'input window, operand 1, single buffered']
    #allocation7 [shape = 's32[1]{0}', space=sflag, size = 0x4, scoped, tag = 'scoped memory for tpu_custom_call.1']
    #allocation8 [shape = 'u8[8192]{0}', space=vmem, size = 0x2000, scoped, tag = 'output window, operand 0, single buffered']
    %8 = vsyncpa [#allocation4], 0
    %9 = vsyncpa [#allocation7], 0
    %10 = vsyncpa [#allocation5], 0
    // Predicated region
    $region2: #{tpu_custom_call.1} parent=1 // pred_check
      _
    $region3: #{tpu_custom_call.1} parent=1 // pred_check_branch
      %12 = sbr.rel (0) target = $region5
    $region4: #{tpu_custom_call.1} parent=1 // pred_region
      %s14 = ssub.s32 256, 256
      %15 = vsyncadd [#allocation4], %s14
      %s16 = sshll.u32 [#allocation3], 4
      %s17 = int_to_ptr.vmem [resolvable:$true] %s16
      %22 = dma.hbm_to_vmem [thread:$0]  %s0, 256, %s17, [#allocation4], 128, 128, 8
    $region5: #{tpu_custom_call.1} parent=1 // pred_fallthru
      _
    // Predicated region
    $region6: #{tpu_custom_call.1} parent=1 // pred_check
      _
    $region7: #{tpu_custom_call.1} parent=1 // pred_check_branch
      %24 = sbr.rel (0) target = $region9
    $region8: #{tpu_custom_call.1} parent=1 // pred_region
      %s26 = ssub.s32 256, 256
      %27 = vsyncadd [#allocation7], %s26
      %s28 = sshll.u32 [#allocation6], 4
      %s29 = int_to_ptr.vmem [resolvable:$true] %s28
      %34 = dma.hbm_to_vmem [thread:$0]  %s1, 256, %s29, [#allocation7], 64, 64, 4
    $region9: #{tpu_custom_call.1} parent=1 // pred_fallthru
      _
    // Predicated region
    $region10: #{tpu_custom_call.1} parent=1 // pred_check
      _
    $region11: #{tpu_custom_call.1} parent=1 // pred_check_branch
      %36 = sbr.rel (0) target = $region13
    $region12: #{tpu_custom_call.1} parent=1 // pred_region
      _
    $region13: #{tpu_custom_call.1} parent=1 // pred_fallthru
      _
    // Predicated region
    $region14: #{tpu_custom_call.1} parent=1 // pred_check
      _
    $region15: #{tpu_custom_call.1} parent=1 // pred_check_branch
      %38 = sbr.rel (0) target = $region17
    $region16: #{tpu_custom_call.1} parent=1 // pred_region
      %39 = dma.done [#allocation4], 256
    $region17: #{tpu_custom_call.1} parent=1 // pred_fallthru
      _
    // Predicated region
    $region18: #{tpu_custom_call.1} parent=1 // pred_check
      _
    $region19: #{tpu_custom_call.1} parent=1 // pred_check_branch
      %41 = sbr.rel (0) target = $region21
    $region20: #{tpu_custom_call.1} parent=1 // pred_region
      %42 = dma.done [#allocation7], 256
    $region21: #{tpu_custom_call.1} parent=1 // pred_fallthru
      _
    %p44 = scmp.eq.s32.totalorder 0, 0
    // Predicated region
    $region22: #{tpu_custom_call.1} parent=1 // pred_check
      %p45 = pneg %p44
    $region23: #{tpu_custom_call.1} parent=1 // pred_check_branch
      %47 = sbr.rel (%p45) target = $region25
    $region24: #{tpu_custom_call.1} parent=1 // pred_region
      %v48 = vld [vmem:[#allocation3] sm:$0xff]
      %v49 = vld [vmem:[#allocation3 + $0x8] sm:$0xff]
      %vm50 = vcmask 261120
      %v51 = vsel %vm50, %v48, 0.0
      %52 = vadd.xlane.f32.xlu0 %v51
      %v53 = vpop.xlane.xlu0 %52
      %v54 = vsel %vm50, %v49, 0.0
      %55 = vadd.xlane.f32.xlu0 %v54
      %v56 = vpop.xlane.xlu0 %55
      %v57 = vmul.f32 %v48, %v48
      %v58 = vmul.f32 %v49, %v49
      %v59 = vsel %vm50, %v57, 0.0
      %60 = vadd.xlane.f32.xlu0 %v59
      %v61 = vpop.xlane.xlu0 %60
      %v62 = vsel %vm50, %v58, 0.0
      %63 = vadd.xlane.f32.xlu0 %v62
      %v64 = vpop.xlane.xlu0 %63
      %v65 = vmul.f32 %v53, 0.03125
      %v66 = vmul.f32 %v56, 0.03125
      %v67 = vmul.f32 %v61, 0.03125
      %v68 = vmul.f32 %v64, 0.03125
      %v69 = vmul.f32 %v65, %v65
      %v70 = vmul.f32 %v66, %v66
      %v71 = vsub.f32 %v67, %v69
      %v72 = vsub.f32 %v68, %v70
      %v73 = vmax.f32 %v71, 0.0
      %v74 = vmax.f32 %v72, 0.0
      %v75 = vadd.f32 %v73, 1e-05
      %v76 = vadd.f32 %v74, 1e-05
      %v77 = vrsqrt.pop %v75
      %v78 = vrsqrt.pop %v76
      %v79 = vsub.f32 %v48, %v65
      %v80 = vsub.f32 %v49, %v66
      %v81 = vmul.f32 %v79, %v77
      %v82 = vmul.f32 %v80, %v78
      %v83 = vpack.c.bf16 %v82, %v81
      %84 = vst.msk [vmem:[#allocation2] sm:$0xff] %vm50, %v83
    $region25: #{tpu_custom_call.1} parent=1 // pred_fallthru
      _
    %v85 = vld [vmem:[#allocation2] sm:$0xff]
    %v86 = vld [vmem:[#allocation6] sm:$0xf]
    %v87 = vld [vmem:[#allocation6 + $0x4] sm:$0xf]
    %v88 = vld [vmem:[#allocation6 + $0x8] sm:$0xf]
    %v89 = vld [vmem:[#allocation6 + $0xc] sm:$0xf]
    %v90 = vld [vmem:[%s2] sm:$0x1]
    %v92 = vlaneseq
    %v93 = vshrl.u32 %v92, 7
    %v94 = vsub.s32 0, %v93
    %v95 = vrot.slane %v90, %v94
    %v101 = vunpack.c.l.b16 %v86
    %v102 = vunpack.c.l.b16 %v87
    %v103 = vunpack.c.l.b16 %v88
    %v104 = vunpack.c.l.b16 %v89
    %v105 = vpack.c.b16 %v102, %v101
    %v106 = vpack.c.b16 %v104, %v103
    %vm109 = vcmask 261120
    %v111 = vsel %vm109, %v85, 0
    %113 = vmatprep.subr.bf16.mxu0 0
    %114 = vmatpush1.bf16.msra.mxu0 %v105
    %115 = vmatprep.subr.bf16.mxu0 0
    %116 = vmatpush1.bf16.msra.mxu0 %v106
    %117 = vmatprep.subr.bf16.mxu0 0
    %118 = vmatpush1.bf16.msra.mxu0 0
    %119 = vmatprep.subr.bf16.mxu0 0
    %120 = vmatpush1.bf16.msra.mxu0 0
    %121 = vmatprep.subr.bf16.mxu0 0
    %122 = vmatpush1.bf16.msra.mxu0 0
    %123 = vmatprep.subr.bf16.mxu0 0
    %124 = vmatpush1.bf16.msra.mxu0 0
    %125 = vmatprep.subr.bf16.mxu0 0
    %126 = vmatpush1.bf16.msra.mxu0 0
    %127 = vmatprep.subr.bf16.mxu0 0
    %128 = vmatpush1.bf16.msra.mxu0 0
    %129 = vmatprep.subr.bf16.mxu0 0
    %130 = vmatpush1.bf16.msra.mxu0 0
    %131 = vmatprep.subr.bf16.mxu0 0
    %132 = vmatpush1.bf16.msra.mxu0 0
    %133 = vmatprep.subr.bf16.mxu0 0
    %134 = vmatpush1.bf16.msra.mxu0 0
    %135 = vmatprep.subr.bf16.mxu0 0
    %136 = vmatpush1.bf16.msra.mxu0 0
    %137 = vmatprep.subr.bf16.mxu0 0
    %138 = vmatpush1.bf16.msra.mxu0 0
    %139 = vmatprep.subr.bf16.mxu0 0
    %140 = vmatpush1.bf16.msra.mxu0 0
    %141 = vmatprep.subr.bf16.mxu0 0
    %142 = vmatpush1.bf16.msra.mxu0 0
    %143 = vmatprep.subr.bf16.mxu0 0
    %144 = vmatpush1.bf16.msra.mxu0 0
    %145 = vmatprep.mubr.bf16.mxu0 0
    %146 = vmatmul.mubr.bf16.gmra.mrb[0].mxu0 %v111
    %v147 = vpop.f32.mrb[0].mxu0
    %v148 = vadd.f32 %v95, %v147
    %v149 = vpop.f32.mrb[0].mxu0
    %v150 = vpop.f32.mrb[0].mxu0
    %v151 = vadd.f32 %v95, %v150
    %v152 = vpop.f32.mrb[0].mxu0
    %153 = vdwg.mxu0
    %154 = vst.msk [vmem:[#allocation8] sm:$0xff] %vm109, %v148
    %155 = vst.msk [vmem:[#allocation8 + $0x8] sm:$0xff] %vm109, %v151
    // Predicated region
    $region26: #{tpu_custom_call.1} parent=1 // pred_check
      _
    $region27: #{tpu_custom_call.1} parent=1 // pred_check_branch
      %157 = sbr.rel (0) target = $region29
    $region28: #{tpu_custom_call.1} parent=1 // pred_region
      %s159 = ssub.s32 256, 256
      %160 = vsyncadd [#allocation5], %s159
      %s161 = sshll.u32 [#allocation8], 4
      %s162 = int_to_ptr.vmem [resolvable:$true] %s161
      %167 = dma.vmem_to_hbm [thread:$0]  %s162, 256, %s3, [#allocation5], 128, 128, 8
    $region29: #{tpu_custom_call.1} parent=1 // pred_fallthru
      _
    // Predicated region
    $region30: #{tpu_custom_call.1} parent=1 // pred_check
      _
    $region31: #{tpu_custom_call.1} parent=1 // pred_check_branch
      %169 = sbr.rel (0) target = $region33
    $region32: #{tpu_custom_call.1} parent=1 // pred_region
      %170 = dma.done [#allocation5], 256
    $region33: #{tpu_custom_call.1} parent=1 // pred_fallthru
      _
    %171 = vsyncpa [#allocation4], 1
    %172 = vsyncpa [#allocation7], 1
    %173 = vsyncpa [#allocation5], 1

</llo_original>
